<compile_context>
chip_gen: v7x
topology: tpu7x:2x2x1
jax: 0.10.0
libtpu: 0.0.40
codegen_flags: <defaults>
</compile_context>

<pallas_src>
import jax
import jax.numpy as jnp
from jax.experimental import pallas as pl
from jax.experimental.pallas import tpu as pltpu


def _log_sigmoid(x):
    # numerically stable logsigmoid(x) = min(x, 0) - log1p(exp(-|x|))
    return jnp.minimum(x, 0.0) - jnp.log1p(jnp.exp(-jnp.abs(x)))


def _round_up(x, m):
    return (x + m - 1) // m * m


def _skipgram_loss_kernel(ctr_ref, ctx_ref, mask_ref, out_ref, acc_ref):
    """One grid step = (batch tile i, context slot j).

    ctr_ref : (TB, D)  center embeddings U[pos_u]  (VMEM-resident across j)
    ctx_ref : (TB, D)  context embeddings for slot j (j==0 is the positive)
    mask_ref: (TB, 1)  1.0 for real batch rows, 0.0 for padding rows
    out_ref : (1, 1)   per-batch-tile partial loss (SMEM)
    acc_ref : (1, 1)   SMEM f32 accumulator carried across the j axis
    """
    j = pl.program_id(1)

    @pl.when(j == 0)
    def _init():
        acc_ref[0, 0] = jnp.float32(0.0)

    u = ctr_ref[...].astype(jnp.float32)    # (TB, D)  bf16 -> f32 (v5e-safe)
    c = ctx_ref[...].astype(jnp.float32)    # (TB, D)
    m = mask_ref[...]                       # (TB, 1) f32

    # score[b] = <U[pos_u[b]], ctx_row[b]>; sign +1 for the positive slot,
    # -1 for negative slots (folded positive/negative path, single VPU pass).
    score = jnp.sum(u * c, axis=-1, keepdims=True)                 # (TB, 1)
    sign = jnp.where(j == 0, jnp.float32(1.0), jnp.float32(-1.0))
    ls = _log_sigmoid(score * sign)                                # (TB, 1)
    acc_ref[0, 0] += jnp.sum(ls * m)

    @pl.when(j == pl.num_programs(1) - 1)
    def _finalize():
        out_ref[0, 0] = -acc_ref[0, 0]


@jax.jit
def skipgram_loss_pallas(u_emb, v_emb, pos_u, pos_v, neg_v):
    """word2vec negative-sampling loss; gathers in XLA, hot loop in Pallas."""
    B = pos_u.shape[0]
    K = neg_v.shape[1]
    D = u_emb.shape[1]

    # Batch tile: multiple of 16 (bf16 sublane packing), capped so double-
    # buffered tiles stay tiny even under v7x's 64 MiB VMEM.
    TB = min(512, _round_up(B, 16))
    B_pad = _round_up(B, TB)
    num_b_tiles = B_pad // TB
    pad = B_pad - B

    pos_u_p = jnp.pad(pos_u, (0, pad))
    pos_v_p = jnp.pad(pos_v, (0, pad))
    neg_v_p = jnp.pad(neg_v, ((0, pad), (0, 0)))
    mask = (jnp.arange(B_pad) < B).astype(jnp.float32)[:, None]      # (B_pad,1)

    # Fold positive into slot 0, then flatten (B_pad, K+1) j-major so a
    # (TB, D) block at block-row (j*num_b_tiles + i) is slot j of batch tile i.
    ctx_idx = jnp.concatenate([pos_v_p[:, None], neg_v_p], axis=1)   # (B_pad,K+1)
    ctx_idx = ctx_idx.T.reshape(-1)                                  # ((K+1)*B_pad,)

    ctr = jnp.take(u_emb, pos_u_p, axis=0)        # (B_pad, D)       bf16
    ctx = jnp.take(v_emb, ctx_idx, axis=0)        # ((K+1)*B_pad, D) bf16

    grid_spec = pltpu.PrefetchScalarGridSpec(
        num_scalar_prefetch=0,
        grid=(num_b_tiles, K + 1),
        in_specs=[
            pl.BlockSpec((TB, D), lambda i, j: (i, 0)),                    # ctr
            pl.BlockSpec((TB, D), lambda i, j: (j * num_b_tiles + i, 0)),  # ctx
            pl.BlockSpec((TB, 1), lambda i, j: (i, 0)),                    # mask
        ],
        out_specs=pl.BlockSpec((1, 1), lambda i, j: (i, 0),
                               memory_space=pltpu.MemorySpace.SMEM),
        scratch_shapes=[pltpu.SMEM((1, 1), jnp.float32)],
    )
    partials = pl.pallas_call(
        _skipgram_loss_kernel,
        out_shape=jax.ShapeDtypeStruct((num_b_tiles, 1), jnp.float32),
        grid_spec=grid_spec,
        compiler_params=pltpu.CompilerParams(
            dimension_semantics=("parallel", "arbitrary")),
    )(ctr, ctx, mask)
    return jnp.sum(partials)


class SkipGramModelJAX:
    """JAX/Pallas port of the PyTorch SkipGramModel forward pass."""

    def __init__(self, emb_size, emb_dimension, key, param_dtype=jnp.bfloat16):
        self.emb_size = emb_size
        self.emb_dimension = emb_dimension
        initrange = 0.5 / emb_dimension  # matches the PyTorch code path
        u = jax.random.uniform(key, (emb_size, emb_dimension), jnp.float32,
                               minval=-initrange, maxval=initrange)
        # bf16 storage halves HBM traffic on this bandwidth-bound kernel;
        # compute is upcast to f32 inside the kernel.
        self.u_embeddings = u.astype(param_dtype)
        self.v_embeddings = jnp.zeros((emb_size, emb_dimension), param_dtype)

    def forward(self, pos_u, pos_v, neg_v):
        return skipgram_loss_pallas(self.u_embeddings, self.v_embeddings,
                                    pos_u, pos_v, neg_v)


def _reference_loss(u_emb, v_emb, pos_u, pos_v, neg_v):
    """Pure-JAX reference mirroring the PyTorch forward exactly."""
    emb_u = u_emb[pos_u].astype(jnp.float32)
    emb_v = v_emb[pos_v].astype(jnp.float32)
    score = _log_sigmoid(jnp.sum(emb_u * emb_v, axis=1))
    neg_emb_v = v_emb[neg_v].astype(jnp.float32)
    neg_score = _log_sigmoid(-jnp.einsum('bkd,bd->bk', neg_emb_v, emb_u))
    return -(jnp.sum(score) + jnp.sum(neg_score))


if __name__ == "__main__":
    key = jax.random.PRNGKey(0)
    k_emb, k_u, k_v, k_neg, k_vtab = jax.random.split(key, 5)

    emb_size = 64        # vocabulary size
    emb_dimension = 32   # embedding dim
    B = 8                # batch of (center, context) pairs
    K = 5                # negatives per positive pair

    model = SkipGramModelJAX(emb_size, emb_dimension, k_emb)

    pos_u = jax.random.randint(k_u, (B,), 0, emb_size, dtype=jnp.int32)
    pos_v = jax.random.randint(k_v, (B,), 0, emb_size, dtype=jnp.int32)
    neg_v = jax.random.randint(k_neg, (B, K), 0, emb_size, dtype=jnp.int32)

    # 1) Faithful model forward (v_embeddings initialized to zero, as in PyTorch).
    loss = jax.block_until_ready(model.forward(pos_u, pos_v, neg_v))
    ref = _reference_loss(model.u_embeddings, model.v_embeddings,
                          pos_u, pos_v, neg_v)
    assert jnp.allclose(loss, ref, rtol=1e-5, atol=1e-4), (loss, ref)

    # 2) Extra correctness check with a non-trivial context table so the
    #    dot products / signs / gather plumbing are actually exercised.
    v_rand = (0.1 * jax.random.normal(k_vtab, (emb_size, emb_dimension),
                                      jnp.float32)).astype(jnp.bfloat16)
    loss2 = jax.block_until_ready(
        skipgram_loss_pallas(model.u_embeddings, v_rand, pos_u, pos_v, neg_v))
    ref2 = _reference_loss(model.u_embeddings, v_rand, pos_u, pos_v, neg_v)
    assert jnp.allclose(loss2, ref2, rtol=1e-5, atol=1e-4), (loss2, ref2)

    print("KERNEL_OK")
</pallas_src>

<mosaic_0001>
module attributes {stable_mosaic.version = 11 : i64} {
  func.func @_skipgram_loss_kernel(%arg0: i32, %arg1: i32, %arg2: memref<16x32xbf16, #tpu.memory_space<vmem>>, %arg3: memref<16x32xbf16, #tpu.memory_space<vmem>>, %arg4: memref<16x1xf32, #tpu.memory_space<vmem>>, %arg5: memref<1x1xf32, #tpu.memory_space<smem>>, %arg6: memref<1x1xf32, #tpu.memory_space<smem>>) attributes {dimension_semantics = [#tpu.dimension_semantics<parallel>, #tpu.dimension_semantics<arbitrary>], iteration_bounds = array<i64: 1, 6>, scalar_prefetch = 0 : i64, scratch_operands = 1 : i64, tpu.core_type = #tpu.core_type<tc>, window_params = [{transform_indices = @transform_0, window_bounds = array<i64: 16, 32>}, {transform_indices = @transform_1, window_bounds = array<i64: 16, 32>}, {transform_indices = @transform_2, window_bounds = array<i64: 16, 1>}, {transform_indices = @transform_3, window_bounds = array<i64: 1, 1>}]} {
    %c0_i32 = arith.constant 0 : i32
    %0 = arith.cmpi eq, %arg1, %c0_i32 : i32
    %1 = arith.extui %0 : i1 to i32
    %c0_i32_0 = arith.constant 0 : i32
    %2 = arith.cmpi ne, %1, %c0_i32_0 : i32
    scf.if %2 {
      %cst_17 = arith.constant 0.000000e+00 : f32
      %c0_18 = arith.constant 0 : index
      %c0_19 = arith.constant 0 : index
      %34 = memref.load %arg6[%c0_18, %c0_19] : memref<1x1xf32, #tpu.memory_space<smem>>
      memref.store %cst_17, %arg6[%c0_18, %c0_19] : memref<1x1xf32, #tpu.memory_space<smem>>
    } else {
    }
    %c0 = arith.constant 0 : index
    %c0_1 = arith.constant 0 : index
    %3 = vector.load %arg2[%c0, %c0_1] : memref<16x32xbf16, #tpu.memory_space<vmem>>, vector<16x32xbf16>
    %4 = arith.extf %3 : vector<16x32xbf16> to vector<16x32xf32>
    %c0_2 = arith.constant 0 : index
    %c0_3 = arith.constant 0 : index
    %5 = vector.load %arg3[%c0_2, %c0_3] : memref<16x32xbf16, #tpu.memory_space<vmem>>, vector<16x32xbf16>
    %6 = arith.extf %5 : vector<16x32xbf16> to vector<16x32xf32>
    %c0_4 = arith.constant 0 : index
    %c0_5 = arith.constant 0 : index
    %7 = vector.load %arg4[%c0_4, %c0_5] : memref<16x1xf32, #tpu.memory_space<vmem>>, vector<16x1xf32>
    %8 = arith.mulf %4, %6 : vector<16x32xf32>
    %cst = arith.constant dense<0.000000e+00> : vector<16xf32>
    %9 = vector.multi_reduction <add>, %8, %cst [1] : vector<16x32xf32> to vector<16xf32>
    %10 = vector.shape_cast %9 : vector<16xf32> to vector<16x1xf32>
    %c0_i32_6 = arith.constant 0 : i32
    %11 = arith.cmpi eq, %arg1, %c0_i32_6 : i32
    %cst_7 = arith.constant 1.000000e+00 : f32
    %cst_8 = arith.constant -1.000000e+00 : f32
    %12 = arith.select %11, %cst_7, %cst_8 : f32
    %13 = vector.broadcast %12 : f32 to vector<16x1xf32>
    %14 = arith.mulf %10, %13 : vector<16x1xf32>
    %cst_9 = arith.constant 0.000000e+00 : f32
    %15 = vector.broadcast %cst_9 : f32 to vector<16x1xf32>
    %16 = arith.minimumf %14, %15 : vector<16x1xf32>
    %17 = math.absf %14 : vector<16x1xf32>
    %cst_10 = arith.constant 0.000000e+00 : f32
    %18 = vector.broadcast %cst_10 : f32 to vector<16x1xf32>
    %19 = arith.subf %18, %17 : vector<16x1xf32>
    %20 = math.exp %19 : vector<16x1xf32>
    %21 = math.log1p %20 : vector<16x1xf32>
    %22 = arith.subf %16, %21 : vector<16x1xf32>
    %c0_11 = arith.constant 0 : index
    %c0_12 = arith.constant 0 : index
    %23 = memref.load %arg6[%c0_11, %c0_12] : memref<1x1xf32, #tpu.memory_space<smem>>
    %24 = arith.mulf %22, %7 : vector<16x1xf32>
    %25 = vector.shape_cast %24 : vector<16x1xf32> to vector<1x16x1xf32>
    %cst_13 = arith.constant dense<0.000000e+00> : vector<1xf32>
    %26 = vector.multi_reduction <add>, %25, %cst_13 [1, 2] : vector<1x16x1xf32> to vector<1xf32>
    %27 = vector.shape_cast %26 : vector<1xf32> to vector<1x1x1xf32>
    %28 = vector.extract %27[0, 0, 0] : f32 from vector<1x1x1xf32>
    %29 = arith.addf %23, %28 : f32
    %c0_14 = arith.constant 0 : index
    %c0_15 = arith.constant 0 : index
    %30 = memref.load %arg6[%c0_14, %c0_15] : memref<1x1xf32, #tpu.memory_space<smem>>
    memref.store %29, %arg6[%c0_14, %c0_15] : memref<1x1xf32, #tpu.memory_space<smem>>
    %c5_i32 = arith.constant 5 : i32
    %31 = arith.cmpi eq, %arg1, %c5_i32 : i32
    %32 = arith.extui %31 : i1 to i32
    %c0_i32_16 = arith.constant 0 : i32
    %33 = arith.cmpi ne, %32, %c0_i32_16 : i32
    scf.if %33 {
      %c0_17 = arith.constant 0 : index
      %c0_18 = arith.constant 0 : index
      %34 = memref.load %arg6[%c0_17, %c0_18] : memref<1x1xf32, #tpu.memory_space<smem>>
      %cst_19 = arith.constant 0.000000e+00 : f32
      %35 = arith.subf %cst_19, %34 : f32
      %c0_20 = arith.constant 0 : index
      %c0_21 = arith.constant 0 : index
      %36 = memref.load %arg5[%c0_20, %c0_21] : memref<1x1xf32, #tpu.memory_space<smem>>
      memref.store %35, %arg5[%c0_20, %c0_21] : memref<1x1xf32, #tpu.memory_space<smem>>
    } else {
    }
    return
  }
  func.func @transform_0(%arg0: i32, %arg1: i32) -> (i32, i32) {
    %c0_i32 = arith.constant 0 : i32
    %c0_i32_0 = arith.constant 0 : i32
    return %arg0, %c0_i32 : i32, i32
  }
  func.func @transform_1(%arg0: i32, %arg1: i32) -> (i32, i32) {
    %c1_i32 = arith.constant 1 : i32
    %0 = arith.muli %arg1, %c1_i32 : i32
    %1 = arith.addi %0, %arg0 : i32
    %c0_i32 = arith.constant 0 : i32
    %c0_i32_0 = arith.constant 0 : i32
    return %1, %c0_i32 : i32, i32
  }
  func.func @transform_2(%arg0: i32, %arg1: i32) -> (i32, i32) {
    %c0_i32 = arith.constant 0 : i32
    %c0_i32_0 = arith.constant 0 : i32
    return %arg0, %c0_i32 : i32, i32
  }
  func.func @transform_3(%arg0: i32, %arg1: i32) -> (i32, i32) {
    %c0_i32 = arith.constant 0 : i32
    %c0_i32_0 = arith.constant 0 : i32
    return %arg0, %c0_i32 : i32, i32
  }
}

</mosaic_0001>

<llo_original>
// kernel: skipgram_loss_pallas.1
$region0: #{skipgram_loss_pallas.1}
  #allocation0 [shape = 'u32[]', space=smem, size = 0x4, offset = 0x4, fixed_abs, tag = 'smem constant byte address 0x4 - core index']
  #allocation1 [shape = 'u32[144,128]{1,0:T(1,128)}', space=vmem, size = 0x12000, scoped, tag = 'internal scratch']
  #allocation2 [shape = 'f32[1,1]{1,0:T(1,128)}', space=smem, size = 0x200, scoped, tag = 'scratch operand']
  %s0 = inlined_call_operand.vmem [shape: bf16[16,32], index: 0, kind: input, shape index: {}]
  %s1 = inlined_call_operand.vmem [shape: bf16[96,32], index: 1, kind: input, shape index: {}]
  %s2 = inlined_call_operand.vmem [shape: f32[16,1], index: 2, kind: input, shape index: {}]
  %s3 = inlined_call_operand.hbm [shape: f32[1,1], index: 3, kind: output, shape index: {}]
  %s4 = sld [smem:[#allocation0]]
  $region53: #{skipgram_loss_pallas.1} parent=0
    _
  %s6 = ssub.s32 1, %s4
  %s7 = scalar_select 0, %s6, %s4
  $region1: #{skipgram_loss_pallas.1} parent=0
    #allocation3 [shape = 'u8[512]{0}', space=smem, size = 0x200, scoped, tag = 'output window, operand 0, single buffered']
    #allocation4 [shape = 's32[2]{0}', space=sflag, size = 0x8, scoped, tag = 'scoped memory for skipgram_loss_pallas.1']
    %8 = vsyncpa [#allocation4], 0
    loop: start=0, step=1, limit=8
    $region2: #{skipgram_loss_pallas.1} parent=1 // loop_pre_header
      _
    $region3: #{skipgram_loss_pallas.1} parent=1 // loop_header
      %s10 = sphi 0, %s14
      %p11 = scmp.ge.s32.totalorder %s10, 8
      %s17 = sphi 0, %s29
      %s18 = sphi 0, %s25
      %s19 = sphi 0, %s17
      %s20 = sphi 0, %s18
      %s21 = sphi 0, %s19
      %s22 = sphi 0, %s20
      %s32 = sphi 0, %s34
      %s35 = sphi 0, %s32
      %s36 = sphi 0, %s35
      %s52 = sphi 0, %s36
      %s60 = sphi 0, %s62
      %s63 = sphi 0, %s60
      %s64 = sphi 0, %s63
      %s80 = sphi 0, %s64
      %s86 = sphi 0, %s88
      %s89 = sphi 0, %s86
      %s90 = sphi 0, %s89
      %s106 = sphi 0, %s90
      %s112 = sphi 0, %s114
      %s115 = sphi 0, %s112
      %s116 = sphi 0, %s115
      %s132 = sphi 0, %s116
    $region4: #{skipgram_loss_pallas.1} parent=1 // loop_header_branch
      %13 = sbr.rel (%p11) target = $region8
    $region5: #{skipgram_loss_pallas.1} parent=1 // loop_body
      %s15 = ssub.s32 %s10, 1
      %s16 = ssub.s32 %s10, 2
      %s23 = sadd.s32 1, %s18
      %p24 = scmp.ge.s32.totalorder %s23, 6
      %s25 = scalar_select %p24, 0, %s23
      %s26 = sadd.s32 1, %s17
      %s27 = scalar_select %p24, %s26, %s17
      %p28 = scmp.ge.s32.totalorder %s27, 1
      %s29 = scalar_select %p28, 0, %s27
      %s30 = ssub.s32 %s17, %s29
      %p31 = scmp.eq.s32.totalorder %s30, 0
      %s33 = sadd.s32 %s32, 1
      %s34 = scalar_select %p31, %s32, %s33
      %p37 = pneg %p31
      %p38 = scmp.eq.s32.totalorder %s10, 5
      %p39 = por %p37, %p38
      %p40 = scmp.ne.s32.totalorder %s32, %s35
      %p41 = scmp.eq.s32.totalorder %s10, 0
      %p42 = por %p40, %p41
      %p43 = scmp.ne.s32.totalorder %s32, %s35
      %p44 = scmp.eq.s32.totalorder %s15, 5
      %p45 = por %p43, %p44
      %p46 = scmp.ne.s32.totalorder %s35, %s36
      %p47 = scmp.eq.s32.totalorder %s15, 0
      %p48 = por %p46, %p47
      %p49 = scmp.ne.s32.totalorder %s35, %s36
      %p50 = scmp.eq.s32.totalorder %s16, 5
      %p51 = por %p49, %p50
      %p53 = scmp.ne.s32.totalorder %s36, %s52
      %p54 = scmp.eq.s32.totalorder %s16, 0
      %p55 = por %p53, %p54
      %s56 = sadd.s32 %s18, %s17
      %s57 = sadd.s32 %s25, %s29
      %s58 = ssub.s32 %s56, %s57
      %p59 = scmp.eq.s32.totalorder %s58, 0
      %s61 = sadd.s32 %s60, 1
      %s62 = scalar_select %p59, %s60, %s61
      %p65 = pneg %p59
      %p66 = scmp.eq.s32.totalorder %s10, 5
      %p67 = por %p65, %p66
      %p68 = scmp.ne.s32.totalorder %s60, %s63
      %p69 = scmp.eq.s32.totalorder %s10, 0
      %p70 = por %p68, %p69
      %p71 = scmp.ne.s32.totalorder %s60, %s63
      %p72 = scmp.eq.s32.totalorder %s15, 5
      %p73 = por %p71, %p72
      %p74 = scmp.ne.s32.totalorder %s63, %s64
      %p75 = scmp.eq.s32.totalorder %s15, 0
      %p76 = por %p74, %p75
      %p77 = scmp.ne.s32.totalorder %s63, %s64
      %p78 = scmp.eq.s32.totalorder %s16, 5
      %p79 = por %p77, %p78
      %p81 = scmp.ne.s32.totalorder %s64, %s80
      %p82 = scmp.eq.s32.totalorder %s16, 0
      %p83 = por %p81, %p82
      %s84 = ssub.s32 %s17, %s29
      %p85 = scmp.eq.s32.totalorder %s84, 0
      %s87 = sadd.s32 %s86, 1
      %s88 = scalar_select %p85, %s86, %s87
      %p91 = pneg %p85
      %p92 = scmp.eq.s32.totalorder %s10, 5
      %p93 = por %p91, %p92
      %p94 = scmp.ne.s32.totalorder %s86, %s89
      %p95 = scmp.eq.s32.totalorder %s10, 0
      %p96 = por %p94, %p95
      %p97 = scmp.ne.s32.totalorder %s86, %s89
      %p98 = scmp.eq.s32.totalorder %s15, 5
      %p99 = por %p97, %p98
      %p100 = scmp.ne.s32.totalorder %s89, %s90
      %p101 = scmp.eq.s32.totalorder %s15, 0
      %p102 = por %p100, %p101
      %p103 = scmp.ne.s32.totalorder %s89, %s90
      %p104 = scmp.eq.s32.totalorder %s16, 5
      %p105 = por %p103, %p104
      %p107 = scmp.ne.s32.totalorder %s90, %s106
      %p108 = scmp.eq.s32.totalorder %s16, 0
      %p109 = por %p107, %p108
      %s110 = ssub.s32 %s17, %s29
      %p111 = scmp.eq.s32.totalorder %s110, 0
      %s113 = sadd.s32 %s112, 1
      %s114 = scalar_select %p111, %s112, %s113
      %p117 = pneg %p111
      %p118 = scmp.eq.s32.totalorder %s10, 5
      %p119 = por %p117, %p118
      %p120 = scmp.ne.s32.totalorder %s112, %s115
      %p121 = scmp.eq.s32.totalorder %s10, 0
      %p122 = por %p120, %p121
      %p123 = scmp.ne.s32.totalorder %s112, %s115
      %p124 = scmp.eq.s32.totalorder %s15, 5
      %p125 = por %p123, %p124
      %p126 = scmp.ne.s32.totalorder %s115, %s116
      %p127 = scmp.eq.s32.totalorder %s15, 0
      %p128 = por %p126, %p127
      %p129 = scmp.ne.s32.totalorder %s115, %s116
      %p130 = scmp.eq.s32.totalorder %s16, 5
      %p131 = por %p129, %p130
      %p133 = scmp.ne.s32.totalorder %s116, %s132
      %p134 = scmp.eq.s32.totalorder %s16, 0
      %p135 = por %p133, %p134
      %p136 = scmp.le.s32.totalorder 1, %s10
      %p137 = scmp.lt.s32.totalorder %s10, 7
      %p138 = pnand %p136, %p137
      %p139 = pneg %p138
      // Predicated region
      $region9: #{skipgram_loss_pallas.1} parent=5 // pred_check
        _
      $region10: #{skipgram_loss_pallas.1} parent=5 // pred_check_branch
        %141 = sbr.rel (%p138) target = $region12
      $region11: #{skipgram_loss_pallas.1} parent=5 // pred_region
        %s142 = ssub.s32 %s10, 1
        // Predicated region
        $region13: #{skipgram_loss_pallas.1} parent=11 // pred_check
          %p143 = pneg %p48
        $region14: #{skipgram_loss_pallas.1} parent=11 // pred_check_branch
          %145 = sbr.rel (%p143) target = $region16
        $region15: #{skipgram_loss_pallas.1} parent=11 // pred_region
          %s146 = smul.u32 2, %s19
          %p147 = scmp.lt.s32.totalorder %s146, 1
          %s148 = scalar_select %p147, %s146, 1
          %s149 = smul.addr %s148, 4
          %s150 = scalar_lea.vmem %s0, %s149
          %s151 = smul.u32 2, %s19
        $region16: #{skipgram_loss_pallas.1} parent=11 // pred_fallthru
          _
        // Predicated region
        $region17: #{skipgram_loss_pallas.1} parent=11 // pred_check
          %p152 = pneg %p102
        $region18: #{skipgram_loss_pallas.1} parent=11 // pred_check_branch
          %154 = sbr.rel (%p152) target = $region20
        $region19: #{skipgram_loss_pallas.1} parent=11 // pred_region
          %s155 = smul.u32 2, %s19
          %p156 = scmp.lt.s32.totalorder %s155, 1
          %s157 = scalar_select %p156, %s155, 1
          %s158 = smul.addr %s157, 8
          %s159 = scalar_lea.vmem %s2, %s158
          %s160 = smul.u32 2, %s19
        $region20: #{skipgram_loss_pallas.1} parent=11 // pred_fallthru
          _
      $region12: #{skipgram_loss_pallas.1} parent=5 // pred_fallthru
        _
      %p161 = scmp.lt.s32.totalorder %s10, 6
      // Predicated region
      $region21: #{skipgram_loss_pallas.1} parent=5 // pred_check
        %p162 = pneg %p161
      $region22: #{skipgram_loss_pallas.1} parent=5 // pred_check_branch
        %164 = sbr.rel (%p162) target = $region24
      $region23: #{skipgram_loss_pallas.1} parent=5 // pred_region
        // Predicated region
        $region25: #{skipgram_loss_pallas.1} parent=23 // pred_check
          %p165 = pneg %p70
        $region26: #{skipgram_loss_pallas.1} parent=23 // pred_check_branch
          %167 = sbr.rel (%p165) target = $region28
        $region27: #{skipgram_loss_pallas.1} parent=23 // pred_region
          %s168 = sadd.s32 %s18, %s17
          %s169 = smul.u32 2, %s168
          %p170 = scmp.lt.s32.totalorder %s169, 11
          %s171 = scalar_select %p170, %s169, 11
          %s172 = smul.addr %s171, 4
          %s173 = scalar_lea.vmem %s1, %s172
          %s174 = sadd.s32 %s18, %s17
          %s175 = smul.u32 2, %s174
        $region28: #{skipgram_loss_pallas.1} parent=23 // pred_fallthru
          _
      $region24: #{skipgram_loss_pallas.1} parent=5 // pred_fallthru
        _
      %p176 = scmp.le.s32.totalorder 1, %s10
      %p177 = scmp.lt.s32.totalorder %s10, 7
      %p178 = pnand %p176, %p177
      %p179 = pneg %p178
      // Predicated region
      $region29: #{skipgram_loss_pallas.1} parent=5 // pred_check
        _
      $region30: #{skipgram_loss_pallas.1} parent=5 // pred_check_branch
        %181 = sbr.rel (%p178) target = $region32
      $region31: #{skipgram_loss_pallas.1} parent=5 // pred_region
        %s182 = ssub.s32 %s10, 1
        %s183 = smul.u32 2, %s19
        %p184 = scmp.lt.s32.totalorder %s183, 1
        %s185 = scalar_select %p184, %s183, 1
        %s186 = smul.addr %s185, 4
        %s187 = scalar_lea.vmem %s0, %s186
        %p188 = pneg %p48
        %p189 = pneg %p45
        %s190 = sadd.s32 %s20, %s19
        %s191 = smul.u32 2, %s190
        %p192 = scmp.lt.s32.totalorder %s191, 11
        %s193 = scalar_select %p192, %s191, 11
        %s194 = smul.addr %s193, 4
        %s195 = scalar_lea.vmem %s1, %s194
        %p196 = pneg %p76
        %p197 = pneg %p73
        %s198 = smul.u32 2, %s19
        %p199 = scmp.lt.s32.totalorder %s198, 1
        %s200 = scalar_select %p199, %s198, 1
        %s201 = smul.addr %s200, 8
        %s202 = scalar_lea.vmem %s2, %s201
        %p203 = pneg %p102
        %p204 = pneg %p99
        %p205 = pneg %p128
        %p206 = pneg %p125
        %s207 = smul.u32 2, %s19
        %p208 = scmp.lt.s32.totalorder %s207, 1
        %s209 = scalar_select %p208, %s207, 1
        %s210 = smul.addr %s209, 4
        %s211 = scalar_lea.vmem %s0, %s210
        %s212 = smul.u32 2, %s19
        %s213 = sadd.s32 %s20, %s19
        %s214 = smul.u32 2, %s213
        %p215 = scmp.lt.s32.totalorder %s214, 11
        %s216 = scalar_select %p215, %s214, 11
        %s217 = smul.addr %s216, 4
        %s218 = scalar_lea.vmem %s1, %s217
        %s219 = sadd.s32 %s20, %s19
        %s220 = smul.u32 2, %s219
        %s221 = smul.u32 2, %s19
        %p222 = scmp.lt.s32.totalorder %s221, 1
        %s223 = scalar_select %p222, %s221, 1
        %s224 = smul.addr %s223, 8
        %s225 = scalar_lea.vmem %s2, %s224
        %s226 = smul.u32 2, %s19
        %p227 = scmp.eq.s32.totalorder %s20, 0
        // Predicated region
        $region33: #{skipgram_loss_pallas.1} parent=31 // pred_check
          %p228 = pneg %p227
        $region34: #{skipgram_loss_pallas.1} parent=31 // pred_check_branch
          %230 = sbr.rel (%p228) target = $region36
        $region35: #{skipgram_loss_pallas.1} parent=31 // pred_region
          %s231 = scalar_lea.smem [#allocation2], 0
          %232 = sst [smem:[%s231]] 0.0
        $region36: #{skipgram_loss_pallas.1} parent=31 // pred_fallthru
          _
        %v233 = vld [vmem:[%s211] sm:$0xf]
        %v234 = vld [vmem:[%s211 + $0x4] sm:$0xf]
        %v235 = vunpack.c.l.bf16 %v233
        %v236 = vunpack.c.l.bf16 %v234
        %v237 = vld [vmem:[%s218] sm:$0xf]
        %v238 = vld [vmem:[%s218 + $0x4] sm:$0xf]
        %v239 = vunpack.c.l.bf16 %v237
        %v240 = vunpack.c.l.bf16 %v238
        %v241 = vld [vmem:[%s225] sm:$0xff]
        %v242 = vld [vmem:[%s225 + $0x8] sm:$0xff]
        %v243 = vmul.f32 %v235, %v239
        %v244 = vmul.f32 %v236, %v240
        %vm245 = vcmask 261120
        %v246 = vsel %vm245, %v243, 0.0
        %247 = vadd.xlane.f32.xlu0 %v246
        %v248 = vpop.xlane.xlu0 %247
        %v249 = vsel %vm245, %v244, 0.0
        %250 = vadd.xlane.f32.xlu0 %v249
        %v251 = vpop.xlane.xlu0 %250
        %s252 = scalar_select %p227, 1.0, -1.0
        %v253 = vstv %s252
        %v254 = vmul.f32 %v248, %v253
        %v255 = vmul.f32 %v251, %v253
        %v256 = vmin.f32 %v254, 0.0
        %v257 = vmin.f32 %v255, 0.0
        %v258 = vand.u32 2147483647, %v254
        %v259 = vand.u32 2147483647, %v255
        %v260 = vsub.f32 0.0, %v258
        %v261 = vsub.f32 0.0, %v259
        %v262 = vmul.f32 %v260, 1.442695
        %v263 = vpow.pop %v262
        %v264 = vmul.f32 %v261, 1.442695
        %v265 = vpow.pop %v264
        %v266 = vadd.f32 %v263, 1.0
        %v267 = vlog2.pop %v266
        %v268 = vmul.f32 %v267, 0.6931472
        %v269 = vmul.f32 -0.5, %v263
        %v270 = vadd.f32 %v269, 1.0
        %v271 = vmul.f32 %v270, %v263
        %v272 = vand.u32 2147483647, %v263
        %vm273 = vcmp.lt.f32.partialorder %v272, 0.0004427343
        %v274 = vsel %vm273, %v271, %v268
        %v275 = vadd.f32 %v265, 1.0
        %v276 = vlog2.pop %v275
        %v277 = vmul.f32 %v276, 0.6931472
        %v278 = vmul.f32 -0.5, %v265
        %v279 = vadd.f32 %v278, 1.0
        %v280 = vmul.f32 %v279, %v265
        %v281 = vand.u32 2147483647, %v265
        %vm282 = vcmp.lt.f32.partialorder %v281, 0.0004427343
        %v283 = vsel %vm282, %v280, %v277
        %v284 = vsub.f32 %v256, %v274
        %v285 = vsub.f32 %v257, %v283
        %s286 = sld [smem:[#allocation2]]
        %v287 = vmul.f32 %v284, %v241
        %v288 = vmul.f32 %v285, %v242
        %vm289 = vcmask 7168
        %v290 = vsel %vm289, %v287, 0.0
        %v291 = vsel %vm289, %v288, 0.0
        %v292 = vadd.f32 %v290, %v291
        %293 = vadd.xlane.f32.xlu0 %v292
        %v294 = vpop.xlane.xlu0 %293
        %v295 = vrot.slane %v294, 4
        %v296 = vadd.f32 %v294, %v295
        %v297 = vrot.slane %v296, 2
        %v298 = vadd.f32 %v296, %v297
        %v299 = vrot.slane %v298, 1
        %v300 = vadd.f32 %v298, %v299
        %s301 = vtos %v300
        %s302 = sadd.f32 %s286, %s301
        %s303 = scalar_lea.smem [#allocation2], 0
        %304 = sst [smem:[%s303]] %s302
        %p305 = scmp.eq.s32.totalorder %s20, 5
        // Predicated region
        $region37: #{skipgram_loss_pallas.1} parent=31 // pred_check
          %p306 = pneg %p305
        $region38: #{skipgram_loss_pallas.1} parent=31 // pred_check_branch
          %308 = sbr.rel (%p306) target = $region40
        $region39: #{skipgram_loss_pallas.1} parent=31 // pred_region
          %s309 = sld [smem:[#allocation2]]
          %s310 = ssub.f32 0.0, %s309
          %s311 = scalar_lea.smem [#allocation3], 0
          %312 = sst [smem:[%s311]] %s310
        $region40: #{skipgram_loss_pallas.1} parent=31 // pred_fallthru
          _
        // Predicated region
        $region41: #{skipgram_loss_pallas.1} parent=31 // pred_check
          %p313 = pneg %p125
        $region42: #{skipgram_loss_pallas.1} parent=31 // pred_check_branch
          %315 = sbr.rel (%p313) target = $region44
        $region43: #{skipgram_loss_pallas.1} parent=31 // pred_region
          %s317 = ssub.s32 16, 16
          %318 = vsyncadd [#allocation4], %s317
          %s319 = smul.addr %s19, 16
          %s320 = scalar_lea.hbm %s3, %s319
          %323 = dma.smem_to_hbm [#allocation3], 16, %s320, [#allocation4]
        $region44: #{skipgram_loss_pallas.1} parent=31 // pred_fallthru
          _
        // Predicated region
        $region45: #{skipgram_loss_pallas.1} parent=31 // pred_check
          %p324 = pneg %p125
        $region46: #{skipgram_loss_pallas.1} parent=31 // pred_check_branch
          %326 = sbr.rel (%p324) target = $region48
        $region47: #{skipgram_loss_pallas.1} parent=31 // pred_region
          %327 = dma.done [#allocation4], 16
        $region48: #{skipgram_loss_pallas.1} parent=31 // pred_fallthru
          _
        %328 = sfence
      $region32: #{skipgram_loss_pallas.1} parent=5 // pred_fallthru
        _
      %p329 = scmp.le.s32.totalorder 2, %s10
      // Predicated region
      $region49: #{skipgram_loss_pallas.1} parent=5 // pred_check
        %p330 = pneg %p329
      $region50: #{skipgram_loss_pallas.1} parent=5 // pred_check_branch
        %332 = sbr.rel (%p330) target = $region52
      $region51: #{skipgram_loss_pallas.1} parent=5 // pred_region
        %s333 = ssub.s32 %s10, 2
      $region52: #{skipgram_loss_pallas.1} parent=5 // pred_fallthru
        _
    $region6: #{skipgram_loss_pallas.1} parent=1 // loop_footer
      %s14 = sadd.s32 1, %s10
    $region7: #{skipgram_loss_pallas.1} parent=1 // loop_footer_branch
      %9 = sbr.rel target = $region3
    $region8: #{skipgram_loss_pallas.1} parent=1 // loop_exit
      _
    %334 = vsyncpa [#allocation4], 1
    %s335 = scalar_lea.sflag [#allocation4], 1
    %336 = vsyncpa %s335, 1

</llo_original>
